<compile_context>
chip_gen: v5e
topology: v5e:2x2
jax: 0.10.0
libtpu: 0.0.40
codegen_flags: <defaults>
</compile_context>

<pallas_src>
import functools

import jax
import jax.numpy as jnp
from jax import lax
from jax.experimental import pallas as pl
from jax.experimental.pallas import tpu as pltpu

EXPANSION = 4
BN_EPS = 1e-5
COMPUTE_DTYPE = jnp.bfloat16           # MXU-native on v5e / v6e / v7x
_VMEM_LIMIT = 32 * 1024 * 1024         # explicit budget (fits v7x 64 MiB phys)
_TAPS = tuple((kh, kw) for kh in range(3) for kw in range(3))


# ----------------------------------------------------------------------------
# Pallas kernels
# ----------------------------------------------------------------------------
def _mm_shift_kernel(x_ref, w_ref, shift_ref, o_ref, *, relu):
    # y = x @ w + shift [+ ReLU]; bf16 operands, f32 accumulate + epilogue.
    y = jnp.dot(x_ref[...], w_ref[...], preferred_element_type=jnp.float32)
    y = y + shift_ref[...]
    if relu:
        y = jnp.maximum(y, 0.0)
    o_ref[...] = y.astype(o_ref.dtype)


def _mm_shift_add_relu_kernel(x_ref, w_ref, shift_ref, res_ref, o_ref):
    # y = relu(x @ w + shift + residual)
    y = jnp.dot(x_ref[...], w_ref[...], preferred_element_type=jnp.float32)
    y = y + shift_ref[...] + res_ref[...].astype(jnp.float32)
    o_ref[...] = jnp.maximum(y, 0.0).astype(o_ref.dtype)


def _conv1_conv3x3_kernel(x_ref, w1_ref, b1_ref, w2_ref, b2_ref, o_ref,
                          xpad_ref, col_ref, *, stride, th, wo, h, w,
                          n_rows, zero_rows):
    """Fused conv1(1x1)+BN+ReLU -> conv2(3x3, pad=1, stride)+BN+ReLU.

    x_ref   : (1, h, w, cin)        input image (bf16), resident across tiles
    w1_ref  : (cin, cmid)           BN-scale-folded 1x1 weight (bf16)
    b1_ref  : (1, cmid)             folded BN shift for conv1 (f32)
    w2_ref  : (9*cmid, cout)        BN-scale-folded 3x3 weight, tap-major K (bf16)
    b2_ref  : (1, cout)             folded BN shift for conv2 (f32)
    o_ref   : (1, th*wo, cout)      output row tile
    xpad_ref: (h+2, w+2, cmid)      padded h1 scratch (in-kernel padding)
    col_ref : (th, wo, 9*cmid)      im2col tile scratch
    """
    t = pl.program_id(1)
    cin = x_ref.shape[3]
    cmid = w1_ref.shape[1]

    r0p = t * th * stride            # first padded-h1 row read by this tile

    # 1) Zero this tile's read window of the padded scratch (halo = padding).
    xpad_ref[pl.ds(r0p, zero_rows), :, :] = jnp.zeros(
        (zero_rows, w + 2, cmid), xpad_ref.dtype)

    # 2) conv1 (1x1) + BN + ReLU for the rows this tile needs (incl. halo),
    #    recomputed per tile so every grid step is self-contained.
    start_u = jnp.clip(r0p - 1, 0, h - n_rows)
    xv = x_ref[0, pl.ds(start_u, n_rows), :, :].reshape(n_rows * w, cin)
    h1 = jnp.dot(xv, w1_ref[...], preferred_element_type=jnp.float32)
    h1 = jnp.maximum(h1 + b1_ref[...], 0.0).astype(xpad_ref.dtype)
    xpad_ref[pl.ds(start_u + 1, n_rows), 1:w + 1, :] = h1.reshape(
        n_rows, w, cmid)

    # 3) conv2 (3x3): build the im2col tile in VMEM, one K = 9*cmid matmul.
    for k, (kh, kw) in enumerate(_TAPS):
        if stride == 1:
            win = xpad_ref[pl.ds(r0p + kh, th), kw:kw + wo, :]
        else:
            win = xpad_ref[pl.ds(r0p + kh, th, stride),
                           pl.ds(kw, wo, stride), :]
        col_ref[:, :, k * cmid:(k + 1) * cmid] = win

    y = jnp.dot(col_ref[...].reshape(th * wo, 9 * cmid), w2_ref[...],
                preferred_element_type=jnp.float32)
    y = jnp.maximum(y + b2_ref[...], 0.0)
    o_ref[0] = y.astype(o_ref.dtype)


# ----------------------------------------------------------------------------
# Pallas wrappers
# ----------------------------------------------------------------------------
def _pick_row_tile(m, target):
    """Largest row tile <= target that divides m (mult. of 8), else target."""
    if m <= target:
        return m                       # single block == full dim (always legal)
    for cand in range(target, 7, -1):  # prefer a divisor: no row padding pass
        if cand % 8 == 0 and m % cand == 0:
            return cand
    return target                      # fall back to padding the rows


def fused_matmul_bn(x, w_scaled, shift, *, relu, residual=None,
                    out_dtype=COMPUTE_DTYPE, tm=512):
    """relu?(x @ w_scaled + shift [+ residual]); BN scale pre-folded into w.

    The full (K, Cout) weight + shift stay VMEM-resident (constant block
    index); only the row tiles stream.  bf16 MXU inputs, f32 accumulation.
    """
    M, K = x.shape
    Kw, cout = w_scaled.shape
    assert K == Kw

    x = x.astype(COMPUTE_DTYPE)
    w = w_scaled.astype(COMPUTE_DTYPE)
    shift2 = shift.reshape(1, cout).astype(jnp.float32)

    TM = _pick_row_tile(M, tm)
    m_pad = pl.cdiv(M, TM) * TM
    pad = m_pad - M
    if pad:
        x = jnp.pad(x, ((0, pad), (0, 0)))
    grid = (m_pad // TM,)

    in_specs = [
        pl.BlockSpec((TM, K), lambda i: (i, 0)),
        pl.BlockSpec((K, cout), lambda i: (0, 0)),   # resident weight
        pl.BlockSpec((1, cout), lambda i: (0, 0)),   # resident shift
    ]
    args = [x, w, shift2]

    if residual is not None:
        res = residual.astype(COMPUTE_DTYPE)
        if pad:
            res = jnp.pad(res, ((0, pad), (0, 0)))
        in_specs.append(pl.BlockSpec((TM, cout), lambda i: (i, 0)))
        args.append(res)
        kernel = _mm_shift_add_relu_kernel
    else:
        kernel = functools.partial(_mm_shift_kernel, relu=relu)

    out = pl.pallas_call(
        kernel,
        out_shape=jax.ShapeDtypeStruct((m_pad, cout), out_dtype),
        grid=grid,
        in_specs=in_specs,
        out_specs=pl.BlockSpec((TM, cout), lambda i: (i, 0)),
        compiler_params=pltpu.CompilerParams(
            dimension_semantics=("parallel",),
            vmem_limit_bytes=_VMEM_LIMIT),
    )(*args)
    return out[:M] if pad else out


def fused_conv1_conv3x3(x_nhwc, w1, b1, w2col, b2, *, stride,
                        out_dtype=COMPUTE_DTYPE, target_rows=512):
    """relu(BN(conv3x3(relu(BN(conv1x1(x)))))) -- h1 never touches HBM.

    w1:    (Cin, Cmid)      BN-scale-folded 1x1 weight
    w2col: (9*Cmid, Cout)   BN-scale-folded 3x3 weight, tap-major along K
    """
    n, h, w, cin = x_nhwc.shape
    cmid = w1.shape[1]
    cout = w2col.shape[1]
    assert w2col.shape[0] == 9 * cmid
    ho = (h - 1) // stride + 1
    wo = (w - 1) // stride + 1

    # Output-row tile: ~target_rows rows of (wo, cout) per step, chosen as a
    # divisor of ho so blocks tile exactly (no padded tail to slice off).
    th = max(1, min(ho, target_rows // max(wo, 1)))
    while ho % th:
        th -= 1
    rt = ho // th
    if rt > 1 and (th * wo) % 8 != 0:   # keep the (8,128) block constraint
        th, rt = ho, 1
    n_rows = min(th * stride + 2, h)              # conv1 rows per tile (halo)
    zero_rows = min(th * stride + 3 - stride, h + 2)  # padded rows read/tile

    kernel = functools.partial(_conv1_conv3x3_kernel, stride=stride, th=th,
                               wo=wo, h=h, w=w, n_rows=n_rows,
                               zero_rows=zero_rows)

    out = pl.pallas_call(
        kernel,
        out_shape=jax.ShapeDtypeStruct((n, ho * wo, cout), out_dtype),
        grid=(n, rt),
        in_specs=[
            pl.BlockSpec((1, h, w, cin), lambda b, t: (b, 0, 0, 0)),
            pl.BlockSpec((cin, cmid), lambda b, t: (0, 0)),     # resident
            pl.BlockSpec((1, cmid), lambda b, t: (0, 0)),       # resident
            pl.BlockSpec((9 * cmid, cout), lambda b, t: (0, 0)),  # resident
            pl.BlockSpec((1, cout), lambda b, t: (0, 0)),       # resident
        ],
        out_specs=pl.BlockSpec((1, th * wo, cout), lambda b, t: (b, t, 0)),
        scratch_shapes=[
            pltpu.VMEM((h + 2, w + 2, cmid), COMPUTE_DTYPE),   # padded h1
            pltpu.VMEM((th, wo, 9 * cmid), COMPUTE_DTYPE),     # im2col tile
        ],
        compiler_params=pltpu.CompilerParams(
            dimension_semantics=("parallel", "parallel"),
            vmem_limit_bytes=_VMEM_LIMIT),
    )(x_nhwc.astype(COMPUTE_DTYPE),
      w1.astype(COMPUTE_DTYPE),
      b1.reshape(1, cmid).astype(jnp.float32),
      w2col.astype(COMPUTE_DTYPE),
      b2.reshape(1, cout).astype(jnp.float32))
    return out.reshape(n, ho, wo, cout)


# ----------------------------------------------------------------------------
# BottleNeck forward
# ----------------------------------------------------------------------------
def _bn_fold(gamma, beta, mean, var):
    scale = gamma / jnp.sqrt(var + BN_EPS)
    shift = beta - mean * scale
    return scale, shift


def bottleneck_forward_nhwc(x_nhwc, params, *, stride=1,
                            out_dtype=COMPUTE_DTYPE):
    """NHWC in, NHWC out. x_nhwc: (N, H, W, Cin) -> (N, Ho, Wo, 4*Cmid)."""
    n, h, w, cin = x_nhwc.shape
    cmid = params["w1"].shape[-1]
    cexp = params["w3"].shape[-1]
    ho = (h - 1) // stride + 1
    wo = (w - 1) // stride + 1

    s1, b1 = _bn_fold(params["g1"], params["b1"], params["m1"], params["v1"])
    s2, b2 = _bn_fold(params["g2"], params["b2"], params["m2"], params["v2"])
    s3, b3 = _bn_fold(params["g3"], params["b3"], params["m3"], params["v3"])

    x_bf = x_nhwc.astype(COMPUTE_DTYPE)

    # ---- shortcut branch ----
    if stride != 1 or cin != cexp:
        ssc, bsc = _bn_fold(params["g_sc"], params["b_sc"],
                            params["m_sc"], params["v_sc"])
        # stride-s 1x1 conv == strided slice (XLA) + plain matmul kernel.
        x_sc = x_bf if stride == 1 else x_bf[:, ::stride, ::stride, :]
        shortcut = fused_matmul_bn(x_sc.reshape(n * ho * wo, cin),
                                   params["w_sc"] * ssc[None, :], bsc,
                                   relu=False)
    else:
        shortcut = x_bf.reshape(n * h * w, cexp)

    # ---- residual branch ----
    # conv1 (1x1 + BN + ReLU) fused with conv2 (3x3 + BN + ReLU): h1 stays in
    # VMEM; 3x3 padding is done in-kernel; one K=9*Cmid matmul per row tile.
    w2col = (params["w2"] * s2[None, None, None, :]).reshape(9 * cmid, cmid)
    h2 = fused_conv1_conv3x3(x_bf, params["w1"] * s1[None, :], b1,
                             w2col, b2, stride=stride)

    # conv3 (1x1 expansion) + BN, fused with shortcut add + final ReLU.
    out = fused_matmul_bn(h2.reshape(n * ho * wo, cmid),
                          params["w3"] * s3[None, :], b3,
                          relu=False, residual=shortcut,
                          out_dtype=out_dtype)
    return out.reshape(n, ho, wo, cexp)


def bottleneck_forward(x_nchw, params, *, stride=1):
    """NCHW wrapper matching the PyTorch module (block itself runs in NHWC)."""
    x = jnp.transpose(x_nchw, (0, 2, 3, 1))     # -> NHWC (hoist when chaining)
    out = bottleneck_forward_nhwc(x, params, stride=stride,
                                  out_dtype=jnp.float32)
    return jnp.transpose(out, (0, 3, 1, 2))     # -> NCHW


# ----------------------------------------------------------------------------
# Pure-JAX f32 reference (for correctness check)
# ----------------------------------------------------------------------------
def bottleneck_reference(x_nchw, params, *, stride=1):
    def conv(x, w_oihw, s, p):
        return lax.conv_general_dilated(
            x, w_oihw, (s, s), [(p, p), (p, p)],
            dimension_numbers=("NCHW", "OIHW", "NCHW"))

    def bn(x, g, b, m, v):
        sc = g / jnp.sqrt(v + BN_EPS)
        sh = b - m * sc
        return x * sc[None, :, None, None] + sh[None, :, None, None]

    w1 = params["w1"].T[:, :, None, None]
    w2 = jnp.transpose(params["w2"], (3, 2, 0, 1))
    w3 = params["w3"].T[:, :, None, None]
    cin = x_nchw.shape[1]
    cexp = params["w3"].shape[-1]

    h = jax.nn.relu(bn(conv(x_nchw, w1, 1, 0),
                       params["g1"], params["b1"], params["m1"], params["v1"]))
    h = jax.nn.relu(bn(conv(h, w2, stride, 1),
                       params["g2"], params["b2"], params["m2"], params["v2"]))
    h = bn(conv(h, w3, 1, 0),
           params["g3"], params["b3"], params["m3"], params["v3"])

    if stride != 1 or cin != cexp:
        wsc = params["w_sc"].T[:, :, None, None]
        sc = bn(conv(x_nchw, wsc, stride, 0),
                params["g_sc"], params["b_sc"], params["m_sc"], params["v_sc"])
    else:
        sc = x_nchw
    return jax.nn.relu(h + sc)


# ----------------------------------------------------------------------------
def make_params(key, in_channels, out_channels):
    cexp = out_channels * EXPANSION
    keys = jax.random.split(key, 12)
    return {
        # conv weights (channels-last: (Cin, Cout) / (kh, kw, Cin, Cout))
        "w1": jax.random.normal(keys[0], (in_channels, out_channels), jnp.float32) * 0.1,
        "w2": jax.random.normal(keys[1], (3, 3, out_channels, out_channels), jnp.float32) * 0.1,
        "w3": jax.random.normal(keys[2], (out_channels, cexp), jnp.float32) * 0.1,
        "w_sc": jax.random.normal(keys[3], (in_channels, cexp), jnp.float32) * 0.1,
        "g1": 1.0 + 0.1 * jax.random.normal(keys[4], (out_channels,), jnp.float32),
        "b1": 0.1 * jax.random.normal(keys[5], (out_channels,), jnp.float32),
        "m1": jnp.zeros((out_channels,), jnp.float32),
        "v1": jnp.ones((out_channels,), jnp.float32),
        "g2": 1.0 + 0.1 * jax.random.normal(keys[6], (out_channels,), jnp.float32),
        "b2": 0.1 * jax.random.normal(keys[7], (out_channels,), jnp.float32),
        "m2": jnp.zeros((out_channels,), jnp.float32),
        "v2": jnp.ones((out_channels,), jnp.float32),
        "g3": 1.0 + 0.1 * jax.random.normal(keys[8], (cexp,), jnp.float32),
        "b3": 0.1 * jax.random.normal(keys[9], (cexp,), jnp.float32),
        "m3": jnp.zeros((cexp,), jnp.float32),
        "v3": jnp.ones((cexp,), jnp.float32),
        "g_sc": 1.0 + 0.1 * jax.random.normal(keys[10], (cexp,), jnp.float32),
        "b_sc": 0.1 * jax.random.normal(keys[11], (cexp,), jnp.float32),
        "m_sc": jnp.zeros((cexp,), jnp.float32),
        "v_sc": jnp.ones((cexp,), jnp.float32),
    }


if __name__ == "__main__":
    key = jax.random.PRNGKey(0)
    k_x1, k_p1, k_x2, k_p2 = jax.random.split(key, 4)

    # Case 1: projection shortcut (in_channels != expansion * out_channels).
    N, Cin, H, W, Cmid = 2, 4, 16, 16, 4
    x1 = jax.random.normal(k_x1, (N, Cin, H, W), jnp.float32)
    p1 = make_params(k_p1, Cin, Cmid)
    y1 = jax.block_until_ready(bottleneck_forward(x1, p1, stride=1))
    y1_ref = bottleneck_reference(x1, p1, stride=1)
    assert y1.shape == (N, Cmid * EXPANSION, H, W)
    assert y1.dtype == jnp.float32
    # bf16 MXU inputs (f32 accumulation) => looser tolerance vs the f32 ref.
    assert jnp.allclose(y1, y1_ref, atol=5e-2, rtol=5e-2), "case1 mismatch"

    # Case 2: identity shortcut (in_channels == expansion * out_channels).
    Cin2 = Cmid * EXPANSION
    x2 = jax.random.normal(k_x2, (N, Cin2, H, W), jnp.float32)
    p2 = make_params(k_p2, Cin2, Cmid)
    y2 = jax.block_until_ready(bottleneck_forward(x2, p2, stride=1))
    y2_ref = bottleneck_reference(x2, p2, stride=1)
    assert jnp.allclose(y2, y2_ref, atol=5e-2, rtol=5e-2), "case2 mismatch"

    print("KERNEL_OK")
</pallas_src>

<mosaic_0001>
module attributes {stable_mosaic.version = 11 : i64} {
  func.func @_mm_shift_kernel(%arg0: i32, %arg1: memref<512x4xbf16, #tpu.memory_space<vmem>>, %arg2: memref<4x16xbf16, #tpu.memory_space<vmem>>, %arg3: memref<1x16xf32, #tpu.memory_space<vmem>>, %arg4: memref<512x16xbf16, #tpu.memory_space<vmem>>) attributes {dimension_semantics = [#tpu.dimension_semantics<parallel>], iteration_bounds = array<i64: 1>, scalar_prefetch = 0 : i64, scratch_operands = 0 : i64, tpu.core_type = #tpu.core_type<tc>, window_params = [{transform_indices = @transform_0, window_bounds = array<i64: 512, 4>}, {pipeline_mode = #tpu.pipeline_mode<synchronous>, transform_indices = @transform_1, window_bounds = array<i64: 4, 16>}, {pipeline_mode = #tpu.pipeline_mode<synchronous>, transform_indices = @transform_2, window_bounds = array<i64: 1, 16>}, {transform_indices = @transform_3, window_bounds = array<i64: 512, 16>}]} {
    %c0 = arith.constant 0 : index
    %c0_0 = arith.constant 0 : index
    %0 = vector.load %arg1[%c0, %c0_0] : memref<512x4xbf16, #tpu.memory_space<vmem>>, vector<512x4xbf16>
    %c0_1 = arith.constant 0 : index
    %c0_2 = arith.constant 0 : index
    %1 = vector.load %arg2[%c0_1, %c0_2] : memref<4x16xbf16, #tpu.memory_space<vmem>>, vector<4x16xbf16>
    %cst = arith.constant dense<0.000000e+00> : vector<512x16xf32>
    %2 = tpu.matmul %0, %1, %cst {dimension_numbers = #tpu.dot_dimension_numbers<[1], [0], [0], [1], [0, 0, 1, 1], [], []>} : vector<512x4xbf16>, vector<4x16xbf16>, vector<512x16xf32> -> vector<512x16xf32>
    %c0_3 = arith.constant 0 : index
    %c0_4 = arith.constant 0 : index
    %3 = vector.load %arg3[%c0_3, %c0_4] : memref<1x16xf32, #tpu.memory_space<vmem>>, vector<1x16xf32>
    %4 = vector.broadcast %3 : vector<1x16xf32> to vector<512x16xf32>
    %5 = arith.addf %2, %4 : vector<512x16xf32>
    %6 = arith.truncf %5 : vector<512x16xf32> to vector<512x16xbf16>
    %c0_5 = arith.constant 0 : index
    %c0_6 = arith.constant 0 : index
    %7 = vector.load %arg4[%c0_5, %c0_6] : memref<512x16xbf16, #tpu.memory_space<vmem>>, vector<512x16xbf16>
    tpu.vector_store %arg4[%c0_5, %c0_6], %6 {strides = array<i32>} : memref<512x16xbf16, #tpu.memory_space<vmem>>, vector<512x16xbf16>,
    return
  }
  func.func @transform_0(%arg0: i32) -> (i32, i32) {
    %c0_i32 = arith.constant 0 : i32
    %c0_i32_0 = arith.constant 0 : i32
    return %arg0, %c0_i32 : i32, i32
  }
  func.func @transform_1(%arg0: i32) -> (i32, i32) {
    %c0_i32 = arith.constant 0 : i32
    %c0_i32_0 = arith.constant 0 : i32
    %c0_i32_1 = arith.constant 0 : i32
    return %c0_i32, %c0_i32_0 : i32, i32
  }
  func.func @transform_2(%arg0: i32) -> (i32, i32) {
    %c0_i32 = arith.constant 0 : i32
    %c0_i32_0 = arith.constant 0 : i32
    %c0_i32_1 = arith.constant 0 : i32
    return %c0_i32, %c0_i32_0 : i32, i32
  }
  func.func @transform_3(%arg0: i32) -> (i32, i32) {
    %c0_i32 = arith.constant 0 : i32
    %c0_i32_0 = arith.constant 0 : i32
    return %arg0, %c0_i32 : i32, i32
  }
}

</mosaic_0001>

<llo_original>
// kernel: tpu_custom_call.1
$region0: #{tpu_custom_call.1}
  #allocation0 [shape = 'u32[]', space=smem, size = 0x4, offset = 0x4, fixed_abs, tag = 'smem constant byte address 0x4 - core index']
  #allocation1 [shape = 'u32[72,128]{1,0:T(1,128)}', space=vmem, size = 0x9000, scoped, tag = 'internal scratch']
  %s0 = inlined_call_operand.vmem [shape: bf16[512,4], index: 0, kind: input, shape index: {}]
  %s1 = inlined_call_operand.vmem [shape: bf16[4,16], index: 1, kind: input, shape index: {}]
  %s2 = inlined_call_operand.vmem [shape: f32[1,16], index: 2, kind: input, shape index: {}]
  %s3 = inlined_call_operand.vmem [shape: bf16[512,16], index: 3, kind: output, shape index: {}]
  %s4 = sld [smem:[#allocation0]]
  $region22: #{tpu_custom_call.1} parent=0
    _
  %s6 = ssub.s32 1, %s4
  %s7 = scalar_select 0, %s6, %s4
  // Predicated region
  $region2: #{tpu_custom_call.1} parent=0 // pred_check
    _
  $region3: #{tpu_custom_call.1} parent=0 // pred_check_branch
    %9 = sbr.rel (0) target = $region5
  $region4: #{tpu_custom_call.1} parent=0 // pred_region
    _
  $region5: #{tpu_custom_call.1} parent=0 // pred_fallthru
    _
  // Predicated region
  $region6: #{tpu_custom_call.1} parent=0 // pred_check
    _
  $region7: #{tpu_custom_call.1} parent=0 // pred_check_branch
    %11 = sbr.rel (0) target = $region9
  $region8: #{tpu_custom_call.1} parent=0 // pred_region
    _
  $region9: #{tpu_custom_call.1} parent=0 // pred_fallthru
    _
  // Predicated region
  $region10: #{tpu_custom_call.1} parent=0 // pred_check
    _
  $region11: #{tpu_custom_call.1} parent=0 // pred_check_branch
    %13 = sbr.rel (0) target = $region13
  $region12: #{tpu_custom_call.1} parent=0 // pred_region
    _
  $region13: #{tpu_custom_call.1} parent=0 // pred_fallthru
    _
  %v15 = vld [vmem:[%s0] sm:$0xf]
  %v16 = vld [vmem:[%s0 + $0x4] sm:$0xf]
  %v17 = vld [vmem:[%s0 + $0x8] sm:$0xf]
  %v18 = vld [vmem:[%s0 + $0xc] sm:$0xf]
  %v19 = vld [vmem:[%s0 + $0x10] sm:$0xf]
  %v20 = vld [vmem:[%s0 + $0x14] sm:$0xf]
  %v21 = vld [vmem:[%s0 + $0x18] sm:$0xf]
  %v22 = vld [vmem:[%s0 + $0x1c] sm:$0xf]
  %v23 = vld [vmem:[%s0 + $0x20] sm:$0xf]
  %v24 = vld [vmem:[%s0 + $0x24] sm:$0xf]
  %v25 = vld [vmem:[%s0 + $0x28] sm:$0xf]
  %v26 = vld [vmem:[%s0 + $0x2c] sm:$0xf]
  %v27 = vld [vmem:[%s0 + $0x30] sm:$0xf]
  %v28 = vld [vmem:[%s0 + $0x34] sm:$0xf]
  %v29 = vld [vmem:[%s0 + $0x38] sm:$0xf]
  %v30 = vld [vmem:[%s0 + $0x3c] sm:$0xf]
  %v31 = vld [vmem:[%s0 + $0x40] sm:$0xf]
  %v32 = vld [vmem:[%s0 + $0x44] sm:$0xf]
  %v33 = vld [vmem:[%s0 + $0x48] sm:$0xf]
  %v34 = vld [vmem:[%s0 + $0x4c] sm:$0xf]
  %v35 = vld [vmem:[%s0 + $0x50] sm:$0xf]
  %v36 = vld [vmem:[%s0 + $0x54] sm:$0xf]
  %v37 = vld [vmem:[%s0 + $0x58] sm:$0xf]
  %v38 = vld [vmem:[%s0 + $0x5c] sm:$0xf]
  %v39 = vld [vmem:[%s0 + $0x60] sm:$0xf]
  %v40 = vld [vmem:[%s0 + $0x64] sm:$0xf]
  %v41 = vld [vmem:[%s0 + $0x68] sm:$0xf]
  %v42 = vld [vmem:[%s0 + $0x6c] sm:$0xf]
  %v43 = vld [vmem:[%s0 + $0x70] sm:$0xf]
  %v44 = vld [vmem:[%s0 + $0x74] sm:$0xf]
  %v45 = vld [vmem:[%s0 + $0x78] sm:$0xf]
  %v46 = vld [vmem:[%s0 + $0x7c] sm:$0xf]
  %v47 = vld [vmem:[%s0 + $0x80] sm:$0xf]
  %v48 = vld [vmem:[%s0 + $0x84] sm:$0xf]
  %v49 = vld [vmem:[%s0 + $0x88] sm:$0xf]
  %v50 = vld [vmem:[%s0 + $0x8c] sm:$0xf]
  %v51 = vld [vmem:[%s0 + $0x90] sm:$0xf]
  %v52 = vld [vmem:[%s0 + $0x94] sm:$0xf]
  %v53 = vld [vmem:[%s0 + $0x98] sm:$0xf]
  %v54 = vld [vmem:[%s0 + $0x9c] sm:$0xf]
  %v55 = vld [vmem:[%s0 + $0xa0] sm:$0xf]
  %v56 = vld [vmem:[%s0 + $0xa4] sm:$0xf]
  %v57 = vld [vmem:[%s0 + $0xa8] sm:$0xf]
  %v58 = vld [vmem:[%s0 + $0xac] sm:$0xf]
  %v59 = vld [vmem:[%s0 + $0xb0] sm:$0xf]
  %v60 = vld [vmem:[%s0 + $0xb4] sm:$0xf]
  %v61 = vld [vmem:[%s0 + $0xb8] sm:$0xf]
  %v62 = vld [vmem:[%s0 + $0xbc] sm:$0xf]
  %v63 = vld [vmem:[%s0 + $0xc0] sm:$0xf]
  %v64 = vld [vmem:[%s0 + $0xc4] sm:$0xf]
  %v65 = vld [vmem:[%s0 + $0xc8] sm:$0xf]
  %v66 = vld [vmem:[%s0 + $0xcc] sm:$0xf]
  %v67 = vld [vmem:[%s0 + $0xd0] sm:$0xf]
  %v68 = vld [vmem:[%s0 + $0xd4] sm:$0xf]
  %v69 = vld [vmem:[%s0 + $0xd8] sm:$0xf]
  %v70 = vld [vmem:[%s0 + $0xdc] sm:$0xf]
  %v71 = vld [vmem:[%s0 + $0xe0] sm:$0xf]
  %v72 = vld [vmem:[%s0 + $0xe4] sm:$0xf]
  %v73 = vld [vmem:[%s0 + $0xe8] sm:$0xf]
  %v74 = vld [vmem:[%s0 + $0xec] sm:$0xf]
  %v75 = vld [vmem:[%s0 + $0xf0] sm:$0xf]
  %v76 = vld [vmem:[%s0 + $0xf4] sm:$0xf]
  %v77 = vld [vmem:[%s0 + $0xf8] sm:$0xf]
  %v78 = vld [vmem:[%s0 + $0xfc] sm:$0xf]
  %v79 = vld [vmem:[%s1] sm:$0x3]
  %v80 = vld [vmem:[%s2] sm:$0x1]
  %v82 = vperm.slane %v80, 0
  %v148 = vunpack.c.l.b16 %v15
  %v149 = vunpack.c.l.b16 %v16
  %v150 = vunpack.c.l.b16 %v17
  %v151 = vunpack.c.l.b16 %v18
  %v152 = vunpack.c.l.b16 %v19
  %v153 = vunpack.c.l.b16 %v20
  %v154 = vunpack.c.l.b16 %v21
  %v155 = vunpack.c.l.b16 %v22
  %v156 = vunpack.c.l.b16 %v23
  %v157 = vunpack.c.l.b16 %v24
  %v158 = vunpack.c.l.b16 %v25
  %v159 = vunpack.c.l.b16 %v26
  %v160 = vunpack.c.l.b16 %v27
  %v161 = vunpack.c.l.b16 %v28
  %v162 = vunpack.c.l.b16 %v29
  %v163 = vunpack.c.l.b16 %v30
  %v164 = vunpack.c.l.b16 %v31
  %v165 = vunpack.c.l.b16 %v32
  %v166 = vunpack.c.l.b16 %v33
  %v167 = vunpack.c.l.b16 %v34
  %v168 = vunpack.c.l.b16 %v35
  %v169 = vunpack.c.l.b16 %v36
  %v170 = vunpack.c.l.b16 %v37
  %v171 = vunpack.c.l.b16 %v38
  %v172 = vunpack.c.l.b16 %v39
  %v173 = vunpack.c.l.b16 %v40
  %v174 = vunpack.c.l.b16 %v41
  %v175 = vunpack.c.l.b16 %v42
  %v176 = vunpack.c.l.b16 %v43
  %v177 = vunpack.c.l.b16 %v44
  %v178 = vunpack.c.l.b16 %v45
  %v179 = vunpack.c.l.b16 %v46
  %v180 = vunpack.c.l.b16 %v47
  %v181 = vunpack.c.l.b16 %v48
  %v182 = vunpack.c.l.b16 %v49
  %v183 = vunpack.c.l.b16 %v50
  %v184 = vunpack.c.l.b16 %v51
  %v185 = vunpack.c.l.b16 %v52
  %v186 = vunpack.c.l.b16 %v53
  %v187 = vunpack.c.l.b16 %v54
  %v188 = vunpack.c.l.b16 %v55
  %v189 = vunpack.c.l.b16 %v56
  %v190 = vunpack.c.l.b16 %v57
  %v191 = vunpack.c.l.b16 %v58
  %v192 = vunpack.c.l.b16 %v59
  %v193 = vunpack.c.l.b16 %v60
  %v194 = vunpack.c.l.b16 %v61
  %v195 = vunpack.c.l.b16 %v62
  %v196 = vunpack.c.l.b16 %v63
  %v197 = vunpack.c.l.b16 %v64
  %v198 = vunpack.c.l.b16 %v65
  %v199 = vunpack.c.l.b16 %v66
  %v200 = vunpack.c.l.b16 %v67
  %v201 = vunpack.c.l.b16 %v68
  %v202 = vunpack.c.l.b16 %v69
  %v203 = vunpack.c.l.b16 %v70
  %v204 = vunpack.c.l.b16 %v71
  %v205 = vunpack.c.l.b16 %v72
  %v206 = vunpack.c.l.b16 %v73
  %v207 = vunpack.c.l.b16 %v74
  %v208 = vunpack.c.l.b16 %v75
  %v209 = vunpack.c.l.b16 %v76
  %v210 = vunpack.c.l.b16 %v77
  %v211 = vunpack.c.l.b16 %v78
  %v212 = vpack.c.b16 %v149, %v148
  %v213 = vpack.c.b16 %v151, %v150
  %v214 = vpack.c.b16 %v153, %v152
  %v215 = vpack.c.b16 %v155, %v154
  %v216 = vpack.c.b16 %v157, %v156
  %v217 = vpack.c.b16 %v159, %v158
  %v218 = vpack.c.b16 %v161, %v160
  %v219 = vpack.c.b16 %v163, %v162
  %v220 = vpack.c.b16 %v165, %v164
  %v221 = vpack.c.b16 %v167, %v166
  %v222 = vpack.c.b16 %v169, %v168
  %v223 = vpack.c.b16 %v171, %v170
  %v224 = vpack.c.b16 %v173, %v172
  %v225 = vpack.c.b16 %v175, %v174
  %v226 = vpack.c.b16 %v177, %v176
  %v227 = vpack.c.b16 %v179, %v178
  %v228 = vpack.c.b16 %v181, %v180
  %v229 = vpack.c.b16 %v183, %v182
  %v230 = vpack.c.b16 %v185, %v184
  %v231 = vpack.c.b16 %v187, %v186
  %v232 = vpack.c.b16 %v189, %v188
  %v233 = vpack.c.b16 %v191, %v190
  %v234 = vpack.c.b16 %v193, %v192
  %v235 = vpack.c.b16 %v195, %v194
  %v236 = vpack.c.b16 %v197, %v196
  %v237 = vpack.c.b16 %v199, %v198
  %v238 = vpack.c.b16 %v201, %v200
  %v239 = vpack.c.b16 %v203, %v202
  %v240 = vpack.c.b16 %v205, %v204
  %v241 = vpack.c.b16 %v207, %v206
  %v242 = vpack.c.b16 %v209, %v208
  %v243 = vpack.c.b16 %v211, %v210
  %vm244 = vcmask 31744
  %v246 = vsel %vm244, %v212, 0
  %v249 = vsel %vm244, %v213, 0
  %v252 = vsel %vm244, %v214, 0
  %v255 = vsel %vm244, %v215, 0
  %v258 = vsel %vm244, %v216, 0
  %v261 = vsel %vm244, %v217, 0
  %v264 = vsel %vm244, %v218, 0
  %v267 = vsel %vm244, %v219, 0
  %v270 = vsel %vm244, %v220, 0
  %v273 = vsel %vm244, %v221, 0
  %v276 = vsel %vm244, %v222, 0
  %v279 = vsel %vm244, %v223, 0
  %v282 = vsel %vm244, %v224, 0
  %v285 = vsel %vm244, %v225, 0
  %v288 = vsel %vm244, %v226, 0
  %v291 = vsel %vm244, %v227, 0
  %v294 = vsel %vm244, %v228, 0
  %v297 = vsel %vm244, %v229, 0
  %v300 = vsel %vm244, %v230, 0
  %v303 = vsel %vm244, %v231, 0
  %v306 = vsel %vm244, %v232, 0
  %v309 = vsel %vm244, %v233, 0
  %v312 = vsel %vm244, %v234, 0
  %v315 = vsel %vm244, %v235, 0
  %v318 = vsel %vm244, %v236, 0
  %v321 = vsel %vm244, %v237, 0
  %v324 = vsel %vm244, %v238, 0
  %v327 = vsel %vm244, %v239, 0
  %v330 = vsel %vm244, %v240, 0
  %v333 = vsel %vm244, %v241, 0
  %v336 = vsel %vm244, %v242, 0
  %v339 = vsel %vm244, %v243, 0
  %vm341 = vcmask 1041408
  %v343 = vsel %vm341, %v79, 0
  %345 = vmatpush.bf16.msra.mxu0 0
  %346 = vmatpush.bf16.msra.mxu0 0
  %347 = vmatpush.bf16.msra.mxu0 0
  %348 = vmatpush.bf16.msra.mxu0 0
  %349 = vmatpush.bf16.msra.mxu0 0
  %350 = vmatpush.bf16.msra.mxu0 0
  %351 = vmatpush.bf16.msra.mxu0 0
  %352 = vmatpush.bf16.msra.mxu0 %v343
  %353 = vmatmul.bf16.gmra.mxu0 %v246
  %v354 = vpop.f32.mrf.mxu0
  %v355 = vadd.f32 %v82, %v354
  %v356 = vpop.f32.mrf.mxu0
  %v357 = vadd.f32 %v82, %v356
  %358 = vmatmul.bf16.gmra.mxu0 %v249
  %v359 = vpop.f32.mrf.mxu0
  %v360 = vadd.f32 %v82, %v359
  %v361 = vpop.f32.mrf.mxu0
  %v362 = vadd.f32 %v82, %v361
  %363 = vmatmul.bf16.gmra.mxu0 %v252
  %v364 = vpop.f32.mrf.mxu0
  %v365 = vadd.f32 %v82, %v364
  %v366 = vpop.f32.mrf.mxu0
  %v367 = vadd.f32 %v82, %v366
  %368 = vmatmul.bf16.gmra.mxu0 %v255
  %v369 = vpop.f32.mrf.mxu0
  %v370 = vadd.f32 %v82, %v369
  %v371 = vpop.f32.mrf.mxu0
  %v372 = vadd.f32 %v82, %v371
  %373 = vmatmul.bf16.gmra.mxu0 %v258
  %v374 = vpop.f32.mrf.mxu0
  %v375 = vadd.f32 %v82, %v374
  %v376 = vpop.f32.mrf.mxu0
  %v377 = vadd.f32 %v82, %v376
  %378 = vmatmul.bf16.gmra.mxu0 %v261
  %v379 = vpop.f32.mrf.mxu0
  %v380 = vadd.f32 %v82, %v379
  %v381 = vpop.f32.mrf.mxu0
  %v382 = vadd.f32 %v82, %v381
  %383 = vmatmul.bf16.gmra.mxu0 %v264
  %v384 = vpop.f32.mrf.mxu0
  %v385 = vadd.f32 %v82, %v384
  %v386 = vpop.f32.mrf.mxu0
  %v387 = vadd.f32 %v82, %v386
  %388 = vmatmul.bf16.gmra.mxu0 %v267
  %v389 = vpop.f32.mrf.mxu0
  %v390 = vadd.f32 %v82, %v389
  %v391 = vpop.f32.mrf.mxu0
  %v392 = vadd.f32 %v82, %v391
  %393 = vmatmul.bf16.gmra.mxu0 %v270
  %v394 = vpop.f32.mrf.mxu0
  %v395 = vadd.f32 %v82, %v394
  %v396 = vpop.f32.mrf.mxu0
  %v397 = vadd.f32 %v82, %v396
  %398 = vmatmul.bf16.gmra.mxu0 %v273
  %v399 = vpop.f32.mrf.mxu0
  %v400 = vadd.f32 %v82, %v399
  %v401 = vpop.f32.mrf.mxu0
  %v402 = vadd.f32 %v82, %v401
  %403 = vmatmul.bf16.gmra.mxu0 %v276
  %v404 = vpop.f32.mrf.mxu0
  %v405 = vadd.f32 %v82, %v404
  %v406 = vpop.f32.mrf.mxu0
  %v407 = vadd.f32 %v82, %v406
  %408 = vmatmul.bf16.gmra.mxu0 %v279
  %v409 = vpop.f32.mrf.mxu0
  %v410 = vadd.f32 %v82, %v409
  %v411 = vpop.f32.mrf.mxu0
  %v412 = vadd.f32 %v82, %v411
  %413 = vmatmul.bf16.gmra.mxu0 %v282
  %v414 = vpop.f32.mrf.mxu0
  %v415 = vadd.f32 %v82, %v414
  %v416 = vpop.f32.mrf.mxu0
  %v417 = vadd.f32 %v82, %v416
  %418 = vmatmul.bf16.gmra.mxu0 %v285
  %v419 = vpop.f32.mrf.mxu0
  %v420 = vadd.f32 %v82, %v419
  %v421 = vpop.f32.mrf.mxu0
  %v422 = vadd.f32 %v82, %v421
  %423 = vmatmul.bf16.gmra.mxu0 %v288
  %v424 = vpop.f32.mrf.mxu0
  %v425 = vadd.f32 %v82, %v424
  %v426 = vpop.f32.mrf.mxu0
  %v427 = vadd.f32 %v82, %v426
  %428 = vmatmul.bf16.gmra.mxu0 %v291
  %v429 = vpop.f32.mrf.mxu0
  %v430 = vadd.f32 %v82, %v429
  %v431 = vpop.f32.mrf.mxu0
  %v432 = vadd.f32 %v82, %v431
  %433 = vmatmul.bf16.gmra.mxu0 %v294
  %v434 = vpop.f32.mrf.mxu0
  %v435 = vadd.f32 %v82, %v434
  %v436 = vpop.f32.mrf.mxu0
  %v437 = vadd.f32 %v82, %v436
  %438 = vmatmul.bf16.gmra.mxu0 %v297
  %v439 = vpop.f32.mrf.mxu0
  %v440 = vadd.f32 %v82, %v439
  %v441 = vpop.f32.mrf.mxu0
  %v442 = vadd.f32 %v82, %v441
  %443 = vmatmul.bf16.gmra.mxu0 %v300
  %v444 = vpop.f32.mrf.mxu0
  %v445 = vadd.f32 %v82, %v444
  %v446 = vpop.f32.mrf.mxu0
  %v447 = vadd.f32 %v82, %v446
  %448 = vmatmul.bf16.gmra.mxu0 %v303
  %v449 = vpop.f32.mrf.mxu0
  %v450 = vadd.f32 %v82, %v449
  %v451 = vpop.f32.mrf.mxu0
  %v452 = vadd.f32 %v82, %v451
  %453 = vmatmul.bf16.gmra.mxu0 %v306
  %v454 = vpop.f32.mrf.mxu0
  %v455 = vadd.f32 %v82, %v454
  %v456 = vpop.f32.mrf.mxu0
  %v457 = vadd.f32 %v82, %v456
  %458 = vmatmul.bf16.gmra.mxu0 %v309
  %v459 = vpop.f32.mrf.mxu0
  %v460 = vadd.f32 %v82, %v459
  %v461 = vpop.f32.mrf.mxu0
  %v462 = vadd.f32 %v82, %v461
  %463 = vmatmul.bf16.gmra.mxu0 %v312
  %v464 = vpop.f32.mrf.mxu0
  %v465 = vadd.f32 %v82, %v464
  %v466 = vpop.f32.mrf.mxu0
  %v467 = vadd.f32 %v82, %v466
  %468 = vmatmul.bf16.gmra.mxu0 %v315
  %v469 = vpop.f32.mrf.mxu0
  %v470 = vadd.f32 %v82, %v469
  %v471 = vpop.f32.mrf.mxu0
  %v472 = vadd.f32 %v82, %v471
  %473 = vmatmul.bf16.gmra.mxu0 %v318
  %v474 = vpop.f32.mrf.mxu0
  %v475 = vadd.f32 %v82, %v474
  %v476 = vpop.f32.mrf.mxu0
  %v477 = vadd.f32 %v82, %v476
  %478 = vmatmul.bf16.gmra.mxu0 %v321
  %v479 = vpop.f32.mrf.mxu0
  %v480 = vadd.f32 %v82, %v479
  %v481 = vpop.f32.mrf.mxu0
  %v482 = vadd.f32 %v82, %v481
  %483 = vmatmul.bf16.gmra.mxu0 %v324
  %v484 = vpop.f32.mrf.mxu0
  %v485 = vadd.f32 %v82, %v484
  %v486 = vpop.f32.mrf.mxu0
  %v487 = vadd.f32 %v82, %v486
  %488 = vmatmul.bf16.gmra.mxu0 %v327
  %v489 = vpop.f32.mrf.mxu0
  %v490 = vadd.f32 %v82, %v489
  %v491 = vpop.f32.mrf.mxu0
  %v492 = vadd.f32 %v82, %v491
  %493 = vmatmul.bf16.gmra.mxu0 %v330
  %v494 = vpop.f32.mrf.mxu0
  %v495 = vadd.f32 %v82, %v494
  %v496 = vpop.f32.mrf.mxu0
  %v497 = vadd.f32 %v82, %v496
  %498 = vmatmul.bf16.gmra.mxu0 %v333
  %v499 = vpop.f32.mrf.mxu0
  %v500 = vadd.f32 %v82, %v499
  %v501 = vpop.f32.mrf.mxu0
  %v502 = vadd.f32 %v82, %v501
  %503 = vmatmul.bf16.gmra.mxu0 %v336
  %v504 = vpop.f32.mrf.mxu0
  %v505 = vadd.f32 %v82, %v504
  %v506 = vpop.f32.mrf.mxu0
  %v507 = vadd.f32 %v82, %v506
  %508 = vmatmul.bf16.gmra.mxu0 %v339
  %v509 = vpop.f32.mrf.mxu0
  %v510 = vadd.f32 %v82, %v509
  %v511 = vpop.f32.mrf.mxu0
  %v512 = vadd.f32 %v82, %v511
  %513 = vdwg.mxu0
  %v514 = vpack.c.bf16 %v355, %v355
  %v515 = vpack.c.bf16 %v357, %v357
  %v516 = vpack.c.bf16 %v360, %v360
  %v517 = vpack.c.bf16 %v362, %v362
  %v518 = vpack.c.bf16 %v365, %v365
  %v519 = vpack.c.bf16 %v367, %v367
  %v520 = vpack.c.bf16 %v370, %v370
  %v521 = vpack.c.bf16 %v372, %v372
  %v522 = vpack.c.bf16 %v375, %v375
  %v523 = vpack.c.bf16 %v377, %v377
  %v524 = vpack.c.bf16 %v380, %v380
  %v525 = vpack.c.bf16 %v382, %v382
  %v526 = vpack.c.bf16 %v385, %v385
  %v527 = vpack.c.bf16 %v387, %v387
  %v528 = vpack.c.bf16 %v390, %v390
  %v529 = vpack.c.bf16 %v392, %v392
  %v530 = vpack.c.bf16 %v395, %v395
  %v531 = vpack.c.bf16 %v397, %v397
  %v532 = vpack.c.bf16 %v400, %v400
  %v533 = vpack.c.bf16 %v402, %v402
  %v534 = vpack.c.bf16 %v405, %v405
  %v535 = vpack.c.bf16 %v407, %v407
  %v536 = vpack.c.bf16 %v410, %v410
  %v537 = vpack.c.bf16 %v412, %v412
  %v538 = vpack.c.bf16 %v415, %v415
  %v539 = vpack.c.bf16 %v417, %v417
  %v540 = vpack.c.bf16 %v420, %v420
  %v541 = vpack.c.bf16 %v422, %v422
  %v542 = vpack.c.bf16 %v425, %v425
  %v543 = vpack.c.bf16 %v427, %v427
  %v544 = vpack.c.bf16 %v430, %v430
  %v545 = vpack.c.bf16 %v432, %v432
  %v546 = vpack.c.bf16 %v435, %v435
  %v547 = vpack.c.bf16 %v437, %v437
  %v548 = vpack.c.bf16 %v440, %v440
  %v549 = vpack.c.bf16 %v442, %v442
  %v550 = vpack.c.bf16 %v445, %v445
  %v551 = vpack.c.bf16 %v447, %v447
  %v552 = vpack.c.bf16 %v450, %v450
  %v553 = vpack.c.bf16 %v452, %v452
  %v554 = vpack.c.bf16 %v455, %v455
  %v555 = vpack.c.bf16 %v457, %v457
  %v556 = vpack.c.bf16 %v460, %v460
  %v557 = vpack.c.bf16 %v462, %v462
  %v558 = vpack.c.bf16 %v465, %v465
  %v559 = vpack.c.bf16 %v467, %v467
  %v560 = vpack.c.bf16 %v470, %v470
  %v561 = vpack.c.bf16 %v472, %v472
  %v562 = vpack.c.bf16 %v475, %v475
  %v563 = vpack.c.bf16 %v477, %v477
  %v564 = vpack.c.bf16 %v480, %v480
  %v565 = vpack.c.bf16 %v482, %v482
  %v566 = vpack.c.bf16 %v485, %v485
  %v567 = vpack.c.bf16 %v487, %v487
  %v568 = vpack.c.bf16 %v490, %v490
  %v569 = vpack.c.bf16 %v492, %v492
  %v570 = vpack.c.bf16 %v495, %v495
  %v571 = vpack.c.bf16 %v497, %v497
  %v572 = vpack.c.bf16 %v500, %v500
  %v573 = vpack.c.bf16 %v502, %v502
  %v574 = vpack.c.bf16 %v505, %v505
  %v575 = vpack.c.bf16 %v507, %v507
  %v576 = vpack.c.bf16 %v510, %v510
  %v577 = vpack.c.bf16 %v512, %v512
  %vm578 = vcmask 125952
  %579 = vst.msk [vmem:[%s3] sm:$0xf] %vm578, %v514
  %580 = vst.msk [vmem:[%s3 + $0x4] sm:$0xf] %vm578, %v515
  %581 = vst.msk [vmem:[%s3 + $0x8] sm:$0xf] %vm578, %v516
  %582 = vst.msk [vmem:[%s3 + $0xc] sm:$0xf] %vm578, %v517
  %583 = vst.msk [vmem:[%s3 + $0x10] sm:$0xf] %vm578, %v518
  %584 = vst.msk [vmem:[%s3 + $0x14] sm:$0xf] %vm578, %v519
  %585 = vst.msk [vmem:[%s3 + $0x18] sm:$0xf] %vm578, %v520
  %586 = vst.msk [vmem:[%s3 + $0x1c] sm:$0xf] %vm578, %v521
  %587 = vst.msk [vmem:[%s3 + $0x20] sm:$0xf] %vm578, %v522
  %588 = vst.msk [vmem:[%s3 + $0x24] sm:$0xf] %vm578, %v523
  %589 = vst.msk [vmem:[%s3 + $0x28] sm:$0xf] %vm578, %v524
  %590 = vst.msk [vmem:[%s3 + $0x2c] sm:$0xf] %vm578, %v525
  %591 = vst.msk [vmem:[%s3 + $0x30] sm:$0xf] %vm578, %v526
  %592 = vst.msk [vmem:[%s3 + $0x34] sm:$0xf] %vm578, %v527
  %593 = vst.msk [vmem:[%s3 + $0x38] sm:$0xf] %vm578, %v528
  %594 = vst.msk [vmem:[%s3 + $0x3c] sm:$0xf] %vm578, %v529
  %595 = vst.msk [vmem:[%s3 + $0x40] sm:$0xf] %vm578, %v530
  %596 = vst.msk [vmem:[%s3 + $0x44] sm:$0xf] %vm578, %v531
  %597 = vst.msk [vmem:[%s3 + $0x48] sm:$0xf] %vm578, %v532
  %598 = vst.msk [vmem:[%s3 + $0x4c] sm:$0xf] %vm578, %v533
  %599 = vst.msk [vmem:[%s3 + $0x50] sm:$0xf] %vm578, %v534
  %600 = vst.msk [vmem:[%s3 + $0x54] sm:$0xf] %vm578, %v535
  %601 = vst.msk [vmem:[%s3 + $0x58] sm:$0xf] %vm578, %v536
  %602 = vst.msk [vmem:[%s3 + $0x5c] sm:$0xf] %vm578, %v537
  %603 = vst.msk [vmem:[%s3 + $0x60] sm:$0xf] %vm578, %v538
  %604 = vst.msk [vmem:[%s3 + $0x64] sm:$0xf] %vm578, %v539
  %605 = vst.msk [vmem:[%s3 + $0x68] sm:$0xf] %vm578, %v540
  %606 = vst.msk [vmem:[%s3 + $0x6c] sm:$0xf] %vm578, %v541
  %607 = vst.msk [vmem:[%s3 + $0x70] sm:$0xf] %vm578, %v542
  %608 = vst.msk [vmem:[%s3 + $0x74] sm:$0xf] %vm578, %v543
  %609 = vst.msk [vmem:[%s3 + $0x78] sm:$0xf] %vm578, %v544
  %610 = vst.msk [vmem:[%s3 + $0x7c] sm:$0xf] %vm578, %v545
  %611 = vst.msk [vmem:[%s3 + $0x80] sm:$0xf] %vm578, %v546
  %612 = vst.msk [vmem:[%s3 + $0x84] sm:$0xf] %vm578, %v547
  %613 = vst.msk [vmem:[%s3 + $0x88] sm:$0xf] %vm578, %v548
  %614 = vst.msk [vmem:[%s3 + $0x8c] sm:$0xf] %vm578, %v549
  %615 = vst.msk [vmem:[%s3 + $0x90] sm:$0xf] %vm578, %v550
  %616 = vst.msk [vmem:[%s3 + $0x94] sm:$0xf] %vm578, %v551
  %617 = vst.msk [vmem:[%s3 + $0x98] sm:$0xf] %vm578, %v552
  %618 = vst.msk [vmem:[%s3 + $0x9c] sm:$0xf] %vm578, %v553
  %619 = vst.msk [vmem:[%s3 + $0xa0] sm:$0xf] %vm578, %v554
  %620 = vst.msk [vmem:[%s3 + $0xa4] sm:$0xf] %vm578, %v555
  %621 = vst.msk [vmem:[%s3 + $0xa8] sm:$0xf] %vm578, %v556
  %622 = vst.msk [vmem:[%s3 + $0xac] sm:$0xf] %vm578, %v557
  %623 = vst.msk [vmem:[%s3 + $0xb0] sm:$0xf] %vm578, %v558
  %624 = vst.msk [vmem:[%s3 + $0xb4] sm:$0xf] %vm578, %v559
  %625 = vst.msk [vmem:[%s3 + $0xb8] sm:$0xf] %vm578, %v560
  %626 = vst.msk [vmem:[%s3 + $0xbc] sm:$0xf] %vm578, %v561
  %627 = vst.msk [vmem:[%s3 + $0xc0] sm:$0xf] %vm578, %v562
  %628 = vst.msk [vmem:[%s3 + $0xc4] sm:$0xf] %vm578, %v563
  %629 = vst.msk [vmem:[%s3 + $0xc8] sm:$0xf] %vm578, %v564
  %630 = vst.msk [vmem:[%s3 + $0xcc] sm:$0xf] %vm578, %v565
  %631 = vst.msk [vmem:[%s3 + $0xd0] sm:$0xf] %vm578, %v566
  %632 = vst.msk [vmem:[%s3 + $0xd4] sm:$0xf] %vm578, %v567
  %633 = vst.msk [vmem:[%s3 + $0xd8] sm:$0xf] %vm578, %v568
  %634 = vst.msk [vmem:[%s3 + $0xdc] sm:$0xf] %vm578, %v569
  %635 = vst.msk [vmem:[%s3 + $0xe0] sm:$0xf] %vm578, %v570
  %636 = vst.msk [vmem:[%s3 + $0xe4] sm:$0xf] %vm578, %v571
  %637 = vst.msk [vmem:[%s3 + $0xe8] sm:$0xf] %vm578, %v572
  %638 = vst.msk [vmem:[%s3 + $0xec] sm:$0xf] %vm578, %v573
  %639 = vst.msk [vmem:[%s3 + $0xf0] sm:$0xf] %vm578, %v574
  %640 = vst.msk [vmem:[%s3 + $0xf4] sm:$0xf] %vm578, %v575
  %641 = vst.msk [vmem:[%s3 + $0xf8] sm:$0xf] %vm578, %v576
  %642 = vst.msk [vmem:[%s3 + $0xfc] sm:$0xf] %vm578, %v577
  // Predicated region
  $region14: #{tpu_custom_call.1} parent=0 // pred_check
    _
  $region15: #{tpu_custom_call.1} parent=0 // pred_check_branch
    %644 = sbr.rel (0) target = $region17
  $region16: #{tpu_custom_call.1} parent=0 // pred_region
    _
  $region17: #{tpu_custom_call.1} parent=0 // pred_fallthru
    _
  // Predicated region
  $region18: #{tpu_custom_call.1} parent=0 // pred_check
    _
  $region19: #{tpu_custom_call.1} parent=0 // pred_check_branch
    %646 = sbr.rel (0) target = $region21
  $region20: #{tpu_custom_call.1} parent=0 // pred_region
    _
  $region21: #{tpu_custom_call.1} parent=0 // pred_fallthru
    _

</llo_original>
